<compile_context>
chip_gen: v7x
topology: tpu7x:2x2x1
jax: 0.10.0
libtpu: 0.0.40
codegen_flags: <defaults>
</compile_context>

<pallas_src>
import math

import jax
import jax.numpy as jnp
from jax.experimental import pallas as pl
from jax.experimental.pallas import tpu as pltpu

_LANES = 128
_MIB = 1024 * 1024


def _make_sea_kernel(inv_hw):
    def sea_kernel(x_ref, w1t_ref, w2_ref, o_ref):
        # x_ref: (Bt, R, HWp) with R = fold*C ; w1t_ref / w2_ref: (R, Hd), Hd = fold*16
        x = x_ref[...]

        # squeeze: spatial mean, accumulated in f32 (zero HW padding is inert).
        m = jnp.sum(x, axis=-1, keepdims=True, dtype=jnp.float32) * inv_hw   # (Bt, R, 1)

        # excitation on the VPU/XLU (no N=1 MXU matvecs):
        # fc1: h[b, o] = sum_r W1f[r, o] * m[b, r]
        h = jnp.sum(w1t_ref[...] * m, axis=1, keepdims=True)                 # (Bt, 1, Hd)
        h = jnp.maximum(h, 0.0)
        # fc2: g[b, r] = sum_o W2f[r, o] * h[b, o]
        g = jnp.sum(w2_ref[...] * h, axis=2, keepdims=True)                  # (Bt, R, 1)
        g = jax.nn.sigmoid(g)                                                # f32 gate

        # scale: gate math in f32, broadcast multiply in the input dtype
        o_ref[...] = (g.astype(x.dtype) * x).astype(o_ref.dtype)

    return sea_kernel


def _vmem_capacity_bytes():
    """Physical VMEM per TensorCore; conservative fallback if the query fails."""
    try:
        info = pltpu.get_tpu_info()
        for attr in ("vmem_capacity_bytes", "vmem_bytes", "vmem_size_bytes"):
            v = getattr(info, attr, None)
            if v:
                return int(v)
    except Exception:
        pass
    return 64 * _MIB   # v7x per-TC VMEM (smallest of the targets)


def _num_tensorcores():
    """2 TensorCores per chip on v7x; 1 on v5e/v6e (best-effort detection)."""
    try:
        kind = (getattr(jax.devices()[0], "device_kind", "") or "").lower()
        if "v7" in kind or "7x" in kind:
            return 2
    except Exception:
        pass
    return 1


def _choose_batch_tile(nb, bytes_per_slab, block_budget_bytes, num_tc):
    """Largest divisor of nb whose double-buffered in+out blocks fit the budget.

    Single-TC chips (v5e/v6e): fewest grid steps wins (longest DMAs, least
    per-step overhead).  Multi-TC (v7x): prefer a grid that is a multiple of
    num_tc with >= 2 steps per core so each core keeps double-buffering.
    """
    max_bt = max(1, block_budget_bytes // (4 * bytes_per_slab))   # 2 in + 2 out buffers
    divisors = [d for d in range(1, nb + 1) if nb % d == 0]
    feasible = [d for d in divisors if d <= max_bt] or [1]
    if num_tc <= 1:
        return max(feasible)
    good = [d for d in feasible if (nb // d) % num_tc == 0 and (nb // d) >= 2 * num_tc]
    if good:
        return max(good)
    even = [d for d in feasible if (nb // d) % num_tc == 0]
    if even:
        return max(even)
    return max(feasible)


def sea_forward(x, w1, w2, *, vmem_limit_bytes=None, block_budget_bytes=None):
    """x: (B, C, H, W); w1: (16, C) [fc1.weight]; w2: (C, 16) [fc2.weight]."""
    B, C, H, W = x.shape
    HW = H * W
    itemsize = jnp.dtype(x.dtype).itemsize

    # --- generation-aware VMEM budgets -------------------------------------
    if vmem_limit_bytes is None:
        phys = _vmem_capacity_bytes()
        # 128 MiB chips (v5e/v6e) -> 112 MiB scoped; 64 MiB (v7x) -> 48 MiB.
        vmem_limit_bytes = max(32 * _MIB, min(phys - 16 * _MIB, 112 * _MIB))
    if block_budget_bytes is None:
        block_budget_bytes = (int(vmem_limit_bytes) * 3) // 4   # 84 MiB / 36 MiB

    # --- sublane folding: dense (row, lane) slabs when C % pack != 0 --------
    pack = max(1, 32 // itemsize)                 # 8 for f32, 16 for bf16, 32 for int8
    fold = pack // math.gcd(C, pack)
    if fold > 1 and B % fold != 0:
        fold = 1                                  # can't fold cleanly; accept padding
    nb, rows = B // fold, fold * C

    # --- lane-dense last dim: pad HW up to a multiple of 128 if needed ------
    hw_pad = (-HW) % _LANES
    HWp = HW + hw_pad

    xr = x.reshape(nb, rows, HW)
    if hw_pad:
        # Zero padding adds 0 to the spatial sum (inv_hw uses the true HW) and
        # gate * 0 = 0, so it is numerically inert; sliced off below.
        xr = jnp.pad(xr, ((0, 0), (0, 0), (0, hw_pad)))

    # --- block-diagonal excitation weights (identity when fold == 1) --------
    eye = jnp.eye(fold, dtype=jnp.float32)
    w1f = jnp.kron(eye, jnp.transpose(w1).astype(jnp.float32))   # (fold*C, fold*16)
    w2f = jnp.kron(eye, w2.astype(jnp.float32))                  # (fold*C, fold*16)
    hidden = w1f.shape[1]

    # --- batch tiling --------------------------------------------------------
    num_tc = _num_tensorcores()
    b_tile = _choose_batch_tile(nb, rows * HWp * itemsize, block_budget_bytes, num_tc)
    grid = (nb // b_tile,)

    kernel = _make_sea_kernel(1.0 / float(HW))

    out = pl.pallas_call(
        kernel,
        out_shape=jax.ShapeDtypeStruct((nb, rows, HWp), x.dtype),
        grid_spec=pltpu.PrefetchScalarGridSpec(
            num_scalar_prefetch=0,
            grid=grid,
            in_specs=[
                pl.BlockSpec((b_tile, rows, HWp), lambda i: (i, 0, 0)),
                pl.BlockSpec((rows, hidden), lambda i: (0, 0)),
                pl.BlockSpec((rows, hidden), lambda i: (0, 0)),
            ],
            out_specs=pl.BlockSpec((b_tile, rows, HWp), lambda i: (i, 0, 0)),
        ),
        compiler_params=pltpu.CompilerParams(
            dimension_semantics=("parallel",),
            vmem_limit_bytes=int(vmem_limit_bytes),
        ),
        # Elementwise scale of x: reuse x's HBM buffer when x is donated.
        input_output_aliases={0: 0},
    )(xr, w1f, w2f)

    if hw_pad:
        out = out[..., :HW]
    return out.reshape(B, C, H, W)


def sea_reference(x, w1, w2):
    # pure-JAX reference mirroring the PyTorch forward
    avg = jnp.mean(x, axis=(2, 3), keepdims=True)             # (B, C, 1, 1)
    h = jnp.einsum("oc,bcij->boij", w1, avg)                   # (B, 16, 1, 1)
    h = jnp.maximum(h, 0.0)
    g = jnp.einsum("co,boij->bcij", w2, h)                     # (B, C, 1, 1)
    return jax.nn.sigmoid(g) * x


if __name__ == "__main__":
    B, C, H, W = 2, 4, 16, 16
    HIDDEN = 16  # fixed by the module: fc1 is Conv2d(in_planes, 16, 1)

    key = jax.random.PRNGKey(0)
    kx, k1, k2 = jax.random.split(key, 3)

    x = jax.random.normal(kx, (B, C, H, W), dtype=jnp.float32)
    # fc1.weight is (16, C, 1, 1) in PyTorch -> squeezed to (16, C)
    w1 = jax.random.normal(k1, (HIDDEN, C), dtype=jnp.float32) * 0.1
    # fc2.weight is (C, 16, 1, 1) in PyTorch -> squeezed to (C, 16)
    w2 = jax.random.normal(k2, (C, HIDDEN), dtype=jnp.float32) * 0.1

    # Compute the reference BEFORE the kernel call (guards against any
    # in-place aliasing surprise from input_output_aliases).
    ref = jax.block_until_ready(sea_reference(x, w1, w2))

    out = jax.block_until_ready(sea_forward(x, w1, w2))

    assert out.shape == (B, C, H, W)
    assert jnp.allclose(out, ref, atol=1e-4, rtol=1e-4), "mismatch vs reference"

    print("KERNEL_OK")
</pallas_src>

<mosaic_0001>
module attributes {stable_mosaic.version = 11 : i64} {
  func.func @sea_kernel(%arg0: i32, %arg1: memref<1x8x256xf32, #tpu.memory_space<vmem>>, %arg2: memref<8x32xf32, #tpu.memory_space<vmem>>, %arg3: memref<8x32xf32, #tpu.memory_space<vmem>>, %arg4: memref<1x8x256xf32, #tpu.memory_space<vmem>>) attributes {dimension_semantics = [#tpu.dimension_semantics<parallel>], iteration_bounds = array<i64: 1>, scalar_prefetch = 0 : i64, scratch_operands = 0 : i64, tpu.core_type = #tpu.core_type<tc>, window_params = [{transform_indices = @transform_0, window_bounds = array<i64: 1, 8, 256>}, {pipeline_mode = #tpu.pipeline_mode<synchronous>, transform_indices = @transform_1, window_bounds = array<i64: 8, 32>}, {pipeline_mode = #tpu.pipeline_mode<synchronous>, transform_indices = @transform_2, window_bounds = array<i64: 8, 32>}, {transform_indices = @transform_3, window_bounds = array<i64: 1, 8, 256>}]} {
    %c0 = arith.constant 0 : index
    %c0_0 = arith.constant 0 : index
    %c0_1 = arith.constant 0 : index
    %0 = vector.load %arg1[%c0, %c0_0, %c0_1] : memref<1x8x256xf32, #tpu.memory_space<vmem>>, vector<1x8x256xf32>
    %cst = arith.constant dense<0.000000e+00> : vector<1x8xf32>
    %1 = vector.multi_reduction <add>, %0, %cst [2] : vector<1x8x256xf32> to vector<1x8xf32>
    %2 = vector.shape_cast %1 : vector<1x8xf32> to vector<1x8x1xf32>
    %cst_2 = arith.constant 3.906250e-03 : f32
    %3 = vector.broadcast %cst_2 : f32 to vector<1x8x1xf32>
    %4 = arith.mulf %2, %3 : vector<1x8x1xf32>
    %c0_3 = arith.constant 0 : index
    %c0_4 = arith.constant 0 : index
    %5 = vector.load %arg2[%c0_3, %c0_4] : memref<8x32xf32, #tpu.memory_space<vmem>>, vector<8x32xf32>
    %6 = vector.shape_cast %5 : vector<8x32xf32> to vector<1x8x32xf32>
    %7 = vector.broadcast %4 : vector<1x8x1xf32> to vector<1x8x32xf32>
    %8 = arith.mulf %6, %7 : vector<1x8x32xf32>
    %cst_5 = arith.constant dense<0.000000e+00> : vector<1x32xf32>
    %9 = vector.multi_reduction <add>, %8, %cst_5 [1] : vector<1x8x32xf32> to vector<1x32xf32>
    %10 = vector.shape_cast %9 : vector<1x32xf32> to vector<1x1x32xf32>
    %cst_6 = arith.constant 0.000000e+00 : f32
    %11 = vector.broadcast %cst_6 : f32 to vector<1x1x32xf32>
    %12 = arith.maximumf %10, %11 : vector<1x1x32xf32>
    %c0_7 = arith.constant 0 : index
    %c0_8 = arith.constant 0 : index
    %13 = vector.load %arg3[%c0_7, %c0_8] : memref<8x32xf32, #tpu.memory_space<vmem>>, vector<8x32xf32>
    %14 = vector.shape_cast %13 : vector<8x32xf32> to vector<1x8x32xf32>
    %15 = vector.broadcast %12 : vector<1x1x32xf32> to vector<1x8x32xf32>
    %16 = arith.mulf %14, %15 : vector<1x8x32xf32>
    %cst_9 = arith.constant dense<0.000000e+00> : vector<1x8xf32>
    %17 = vector.multi_reduction <add>, %16, %cst_9 [2] : vector<1x8x32xf32> to vector<1x8xf32>
    %18 = vector.shape_cast %17 : vector<1x8xf32> to vector<1x8x1xf32>
    %19 = arith.negf %18 : vector<1x8x1xf32>
    %20 = math.exp %19 : vector<1x8x1xf32>
    %cst_10 = arith.constant 1.000000e+00 : f32
    %21 = vector.broadcast %cst_10 : f32 to vector<1x8x1xf32>
    %22 = arith.addf %21, %20 : vector<1x8x1xf32>
    %23 = arith.divf %21, %22 : vector<1x8x1xf32>
    %24 = vector.broadcast %23 : vector<1x8x1xf32> to vector<1x8x256xf32>
    %25 = arith.mulf %24, %0 : vector<1x8x256xf32>
    %c0_11 = arith.constant 0 : index
    %c0_12 = arith.constant 0 : index
    %c0_13 = arith.constant 0 : index
    %26 = vector.load %arg4[%c0_11, %c0_12, %c0_13] : memref<1x8x256xf32, #tpu.memory_space<vmem>>, vector<1x8x256xf32>
    tpu.vector_store %arg4[%c0_11, %c0_12, %c0_13], %25 {strides = array<i32>} : memref<1x8x256xf32, #tpu.memory_space<vmem>>, vector<1x8x256xf32>,
    return
  }
  func.func @transform_0(%arg0: i32) -> (i32, i32, i32) {
    %c0_i32 = arith.constant 0 : i32
    %c0_i32_0 = arith.constant 0 : i32
    %c0_i32_1 = arith.constant 0 : i32
    return %arg0, %c0_i32, %c0_i32_0 : i32, i32, i32
  }
  func.func @transform_1(%arg0: i32) -> (i32, i32) {
    %c0_i32 = arith.constant 0 : i32
    %c0_i32_0 = arith.constant 0 : i32
    %c0_i32_1 = arith.constant 0 : i32
    return %c0_i32, %c0_i32_0 : i32, i32
  }
  func.func @transform_2(%arg0: i32) -> (i32, i32) {
    %c0_i32 = arith.constant 0 : i32
    %c0_i32_0 = arith.constant 0 : i32
    %c0_i32_1 = arith.constant 0 : i32
    return %c0_i32, %c0_i32_0 : i32, i32
  }
  func.func @transform_3(%arg0: i32) -> (i32, i32, i32) {
    %c0_i32 = arith.constant 0 : i32
    %c0_i32_0 = arith.constant 0 : i32
    %c0_i32_1 = arith.constant 0 : i32
    return %arg0, %c0_i32, %c0_i32_0 : i32, i32, i32
  }
}

</mosaic_0001>

<llo_original>
// kernel: tpu_custom_call.1
$region0: #{tpu_custom_call.1}
  #allocation0 [shape = 'u32[]', space=smem, size = 0x4, offset = 0x4, fixed_abs, tag = 'smem constant byte address 0x4 - core index']
  #allocation1 [shape = 'u32[144,128]{1,0:T(1,128)}', space=vmem, size = 0x12000, scoped, tag = 'internal scratch']
  %s0 = inlined_call_operand.hbm [shape: f32[1,8,256], index: 0, kind: input, shape index: {}, may-alias: {0,3}]
  %s1 = inlined_call_operand.vmem [shape: f32[8,32], index: 1, kind: input, shape index: {}]
  %s2 = inlined_call_operand.vmem [shape: f32[8,32], index: 2, kind: input, shape index: {}]
  %s3 = inlined_call_operand.hbm [shape: f32[1,8,256], index: 3, kind: output, shape index: {}, may-alias: {0,3}]
  %s4 = sld [smem:[#allocation0]]
  $region26: #{tpu_custom_call.1} parent=0
    _
  %s6 = ssub.s32 1, %s4
  %s7 = scalar_select 0, %s6, %s4
  $region1: #{tpu_custom_call.1} parent=0
    #allocation2 [shape = 'u8[8192]{0}', space=vmem, size = 0x2000, scoped, tag = 'input window, operand 0, single buffered']
    #allocation3 [shape = 's32[1]{0}', space=sflag, size = 0x4, scoped, tag = 'scoped memory for tpu_custom_call.1']
    #allocation4 [shape = 's32[1]{0}', space=sflag, size = 0x4, scoped, tag = 'scoped memory for tpu_custom_call.1']
    #allocation5 [shape = 'u8[8192]{0}', space=vmem, size = 0x2000, scoped, tag = 'output window, operand 0, single buffered']
    %8 = vsyncpa [#allocation3], 0
    %9 = vsyncpa [#allocation4], 0
    // Predicated region
    $region2: #{tpu_custom_call.1} parent=1 // pred_check
      _
    $region3: #{tpu_custom_call.1} parent=1 // pred_check_branch
      %11 = sbr.rel (0) target = $region5
    $region4: #{tpu_custom_call.1} parent=1 // pred_region
      %s13 = ssub.s32 256, 256
      %14 = vsyncadd [#allocation3], %s13
      %s16 = sshll.u32 [#allocation2], 4
      %s17 = int_to_ptr.vmem [resolvable:$true] %s16
      %19 = dma.hbm_to_vmem [thread:$0]  %s0, 256, %s17, [#allocation3]
    $region5: #{tpu_custom_call.1} parent=1 // pred_fallthru
      _
    // Predicated region
    $region6: #{tpu_custom_call.1} parent=1 // pred_check
      _
    $region7: #{tpu_custom_call.1} parent=1 // pred_check_branch
      %21 = sbr.rel (0) target = $region9
    $region8: #{tpu_custom_call.1} parent=1 // pred_region
      _
    $region9: #{tpu_custom_call.1} parent=1 // pred_fallthru
      _
    // Predicated region
    $region10: #{tpu_custom_call.1} parent=1 // pred_check
      _
    $region11: #{tpu_custom_call.1} parent=1 // pred_check_branch
      %23 = sbr.rel (0) target = $region13
    $region12: #{tpu_custom_call.1} parent=1 // pred_region
      _
    $region13: #{tpu_custom_call.1} parent=1 // pred_fallthru
      _
    // Predicated region
    $region14: #{tpu_custom_call.1} parent=1 // pred_check
      _
    $region15: #{tpu_custom_call.1} parent=1 // pred_check_branch
      %25 = sbr.rel (0) target = $region17
    $region16: #{tpu_custom_call.1} parent=1 // pred_region
      %26 = dma.done [#allocation3], 256
    $region17: #{tpu_custom_call.1} parent=1 // pred_fallthru
      _
    %v27 = vld [vmem:[#allocation2] sm:$0xff]
    %v28 = vld [vmem:[#allocation2 + $0x8] sm:$0xff]
    %v29 = vadd.f32 %v27, %v28
    %30 = vadd.xlane.f32.xlu0 %v29
    %v31 = vpop.xlane.xlu0 %30
    %v32 = vmul.f32 %v31, 0.00390625
    %v33 = vld [vmem:[%s1] sm:$0xff]
    %v34 = vmul.f32 %v33, %v32
    %vm35 = vcmask 261120
    %v36 = vsel %vm35, %v34, 0.0
    %v37 = vrot.slane %v36, 4
    %v38 = vadd.f32 %v36, %v37
    %v39 = vrot.slane %v38, 2
    %v40 = vadd.f32 %v38, %v39
    %v41 = vrot.slane %v40, 1
    %v42 = vadd.f32 %v40, %v41
    %v43 = vmax.f32 %v42, 0.0
    %v44 = vld [vmem:[%s2] sm:$0xff]
    %v45 = vmul.f32 %v44, %v43
    %v46 = vsel %vm35, %v45, 0.0
    %47 = vadd.xlane.f32.xlu0 %v46
    %v48 = vpop.xlane.xlu0 %47
    %v49 = vxor.u32 %v48, 2147483648
    %v50 = vmul.f32 %v49, 1.442695
    %v51 = vpow.pop %v50
    %v52 = vadd.f32 %v51, 1.0
    %v53 = vrcp.pop %v52
    %v54 = vmul.f32 1.0, %v53
    %v55 = vmul.f32 %v54, %v27
    %v56 = vmul.f32 %v54, %v28
    %57 = vst [vmem:[#allocation5] sm:$0xff] %v55
    %58 = vst [vmem:[#allocation5 + $0x8] sm:$0xff] %v56
    // Predicated region
    $region18: #{tpu_custom_call.1} parent=1 // pred_check
      _
    $region19: #{tpu_custom_call.1} parent=1 // pred_check_branch
      %60 = sbr.rel (0) target = $region21
    $region20: #{tpu_custom_call.1} parent=1 // pred_region
      %s62 = ssub.s32 256, 256
      %63 = vsyncadd [#allocation4], %s62
      %s65 = sshll.u32 [#allocation5], 4
      %s66 = int_to_ptr.vmem [resolvable:$true] %s65
      %68 = dma.vmem_to_hbm [thread:$0]  %s66, 256, %s3, [#allocation4]
    $region21: #{tpu_custom_call.1} parent=1 // pred_fallthru
      _
    // Predicated region
    $region22: #{tpu_custom_call.1} parent=1 // pred_check
      _
    $region23: #{tpu_custom_call.1} parent=1 // pred_check_branch
      %70 = sbr.rel (0) target = $region25
    $region24: #{tpu_custom_call.1} parent=1 // pred_region
      %71 = dma.done [#allocation4], 256
    $region25: #{tpu_custom_call.1} parent=1 // pred_fallthru
      _
    %72 = vsyncpa [#allocation3], 1
    %73 = vsyncpa [#allocation4], 1

</llo_original>
